<compile_context>
chip_gen: v7x
topology: tpu7x:2x2x1
jax: 0.10.0
libtpu: 0.0.40
codegen_flags: <defaults>
</compile_context>

<pallas_src>
import jax
import jax.numpy as jnp
from jax.experimental import pallas as pl
from jax.experimental.pallas import tpu as pltpu

LANE = 128  # TPU lane width; hidden dims padded to a multiple of this.


def _round_up(n, m):
    return ((n + m - 1) // m) * m


def _pad_to(a, shape):
    pads = [(0, t - s) for s, t in zip(a.shape, shape)]
    return jnp.pad(a, pads)


def mlp_kernel(x_ref, w1_ref, b1_ref, w2_ref, b2_ref, w3_ref, b3_ref, out_ref):
    """Fused MLP forward on one batch tile:
       sigmoid(relu(relu(x@W1+b1)@W2+b2)@W3+b3).

    x_ref: (TILE_B, in_dim) f32; w1: (in_dim, H1); w2: (H1, H2);
    w3: (out_dim, H2) (PyTorch row layout); b*: (1, ·) f32;
    out_ref: (TILE_B, out_dim) f32.  All weights/biases are VMEM-resident
    (constant index maps) across the batch grid.
    """
    x = x_ref[...]

    # Layer 1: Linear + ReLU (f32 MXU, f32 accumulate)
    h = jnp.dot(x, w1_ref[...], preferred_element_type=jnp.float32) + b1_ref[...]
    h = jnp.maximum(h, 0.0)

    # Layer 2: Linear + ReLU
    h = jnp.dot(h, w2_ref[...], preferred_element_type=jnp.float32) + b2_ref[...]
    h = jnp.maximum(h, 0.0)

    # Output layer: Linear + sigmoid.
    out_dim = out_ref.shape[-1]
    if out_dim == 1:
        # (1, H2) row vector: VPU multiply + XLU lane-reduce avoids an N=1
        # MXU matmul and keeps the epilogue on (TILE_B, 1) vregs only.
        z = jnp.sum(h * w3_ref[...], axis=-1, keepdims=True) + b3_ref[...]
    else:
        z = jax.lax.dot_general(
            h, w3_ref[...], (((1,), (1,)), ((), ())),
            preferred_element_type=jnp.float32) + b3_ref[...]

    out_ref[...] = pl.reciprocal(1.0 + jnp.exp(-z), approx=False)


def mlp_forward(x, params, *, tile_b=None):
    """Run the fused Pallas MLP.

    Args:
      x: (batch, in_features) f32 (same layout as the PyTorch nn.Linear input).
      params: list of (W, b) in PyTorch layout: W is (out_features, in_features),
              b is (out_features,).
      tile_b: optional batch tile size override (multiple of 8 recommended).

    Returns:
      (batch, out_features) f32 probabilities.
    """
    (w1_pt, b1), (w2_pt, b2), (w3_pt, b3) = params
    batch, in_dim = x.shape
    h1, h2 = w1_pt.shape[0], w2_pt.shape[0]
    out_dim = w3_pt.shape[0]

    # Hidden widths padded to lane multiples (weights only — tiny arrays).
    H1 = _round_up(h1, LANE)
    H2 = _round_up(h2, LANE)

    # Batch tiling: large tiles to amortize the ~600-cycle per-step overhead,
    # >= 2 balanced grid steps when batch allows (v7x megacore), multiple of 256.
    if tile_b is None:
        tile_b = min(2048, max(256, _round_up(pl.cdiv(batch, 2), 256)))
    pbatch = _round_up(batch, tile_b)
    grid = (pbatch // tile_b,)

    # Layout plumbing (wrapper-side, all f32):
    #   W1/W2 -> (in, out) and zero-pad hidden dims to 128 lanes,
    #   W3 stays in PyTorch (out, in) row layout (padded on the hidden axis).
    w1 = _pad_to(w1_pt.T.astype(jnp.float32), (in_dim, H1))
    w2 = _pad_to(w2_pt.T.astype(jnp.float32), (H1, H2))
    w3 = _pad_to(w3_pt.astype(jnp.float32), (out_dim, H2))
    b1p = _pad_to(b1.reshape(1, -1).astype(jnp.float32), (1, H1))
    b2p = _pad_to(b2.reshape(1, -1).astype(jnp.float32), (1, H2))
    b3p = b3.reshape(1, -1).astype(jnp.float32)  # (1, out_dim)

    # x: no feature-dim padding; only cheap row padding to a tile multiple
    # (32 B per padded row).
    xp = x.astype(jnp.float32)
    if pbatch != batch:
        xp = jnp.pad(xp, ((0, pbatch - batch), (0, 0)))

    # Advisory cost estimate (real, de-padded traffic).
    flops = 2 * pbatch * (in_dim * H1 + H1 * H2 + H2 * out_dim)
    bytes_accessed = (
        pbatch * in_dim * 4
        + (w1.size + w2.size + w3.size + b1p.size + b2p.size + b3p.size) * 4
        + pbatch * out_dim * 4)
    cost = pl.CostEstimate(flops=flops,
                           transcendentals=2 * pbatch * out_dim,  # exp + recip
                           bytes_accessed=bytes_accessed)

    resident = lambda a: pl.BlockSpec(a.shape, lambda i: (0, 0))

    out = pl.pallas_call(
        mlp_kernel,
        out_shape=jax.ShapeDtypeStruct((pbatch, out_dim), jnp.float32),
        grid=grid,
        in_specs=[
            pl.BlockSpec((tile_b, in_dim), lambda i: (i, 0)),  # x: batch-tiled
            resident(w1), resident(b1p),
            resident(w2), resident(b2p),
            resident(w3), resident(b3p),
        ],
        out_specs=pl.BlockSpec((tile_b, out_dim), lambda i: (i, 0)),
        compiler_params=pltpu.CompilerParams(
            dimension_semantics=("parallel",)),
        cost_estimate=cost,
    )(xp, w1, b1p, w2, b2p, w3, b3p)

    # Strip batch padding only (a cheap row slice; no feature-dim padding left).
    return out if pbatch == batch else out[:batch]


def xavier_uniform(key, fan_in, fan_out):
    """nn.init.xavier_uniform_ equivalent for a (out, in) PyTorch weight."""
    bound = jnp.sqrt(6.0 / (fan_in + fan_out))
    return jax.random.uniform(key, (fan_out, fan_in), jnp.float32,
                              minval=-bound, maxval=bound)


def init_params(key, layers):
    """Xavier-uniform weights (PyTorch (out, in) layout), zero biases."""
    params = []
    for i in range(len(layers) - 1):
        key, sub = jax.random.split(key)
        w_pt = xavier_uniform(sub, layers[i], layers[i + 1])  # (out, in)
        b = jnp.zeros((layers[i + 1],), jnp.float32)
        params.append((w_pt, b))
    return params


def reference_forward(x, params):
    """Pure-JAX f32 reference (same math as PyTorchMLP.forward in eval mode)."""
    (w1, b1), (w2, b2), (w3, b3) = params
    h = jnp.maximum(x @ w1.T + b1, 0.0)
    h = jnp.maximum(h @ w2.T + b2, 0.0)
    return jax.nn.sigmoid(h @ w3.T + b3)


if __name__ == "__main__":
    # Architecture: layers=[8, 32, 32, 1], activations=['relu','relu'] + ['sigmoid']
    layers = [8, 32, 32, 1]

    key = jax.random.PRNGKey(0)
    params = init_params(key, layers)

    # Small deterministic check (batch=2): single grid step, partial tile rows.
    key, xkey = jax.random.split(key)
    x_small = jax.random.normal(xkey, (2, layers[0]), jnp.float32)
    out_small = jax.block_until_ready(mlp_forward(x_small, params))
    ref_small = reference_forward(x_small, params)
    assert out_small.shape == (2, layers[-1])
    # XLA's default-precision f32 dot in the reference vs. the in-kernel matmul
    # can differ at the ~1e-3 level; keep a safe tolerance.
    assert jnp.allclose(out_small, ref_small, atol=5e-3, rtol=5e-3), (
        out_small, ref_small)

    # Larger, non-tile-multiple batch to exercise the multi-step pipelined grid
    # (2 grid steps -> both v7x TensorCores active).
    key, xkey = jax.random.split(key)
    x_big = jax.random.normal(xkey, (1000, layers[0]), jnp.float32)
    out_big = jax.block_until_ready(mlp_forward(x_big, params))
    ref_big = reference_forward(x_big, params)
    assert out_big.shape == (1000, layers[-1])
    assert jnp.allclose(out_big, ref_big, atol=5e-3, rtol=5e-3)

    print("KERNEL_OK")
</pallas_src>

<mosaic_0001>
module attributes {stable_mosaic.version = 11 : i64} {
  func.func @mlp_kernel(%arg0: i32, %arg1: memref<256x8xf32, #tpu.memory_space<vmem>>, %arg2: memref<8x128xf32, #tpu.memory_space<vmem>>, %arg3: memref<1x128xf32, #tpu.memory_space<vmem>>, %arg4: memref<128x128xf32, #tpu.memory_space<vmem>>, %arg5: memref<1x128xf32, #tpu.memory_space<vmem>>, %arg6: memref<1x128xf32, #tpu.memory_space<vmem>>, %arg7: memref<1x1xf32, #tpu.memory_space<vmem>>, %arg8: memref<256x1xf32, #tpu.memory_space<vmem>>) attributes {dimension_semantics = [#tpu.dimension_semantics<parallel>], iteration_bounds = array<i64: 1>, scalar_prefetch = 0 : i64, scratch_operands = 0 : i64, tpu.core_type = #tpu.core_type<tc>, window_params = [{transform_indices = @transform_0, window_bounds = array<i64: 256, 8>}, {pipeline_mode = #tpu.pipeline_mode<synchronous>, transform_indices = @transform_1, window_bounds = array<i64: 8, 128>}, {pipeline_mode = #tpu.pipeline_mode<synchronous>, transform_indices = @transform_2, window_bounds = array<i64: 1, 128>}, {pipeline_mode = #tpu.pipeline_mode<synchronous>, transform_indices = @transform_3, window_bounds = array<i64: 128, 128>}, {pipeline_mode = #tpu.pipeline_mode<synchronous>, transform_indices = @transform_4, window_bounds = array<i64: 1, 128>}, {pipeline_mode = #tpu.pipeline_mode<synchronous>, transform_indices = @transform_5, window_bounds = array<i64: 1, 128>}, {pipeline_mode = #tpu.pipeline_mode<synchronous>, transform_indices = @transform_6, window_bounds = array<i64: 1, 1>}, {transform_indices = @transform_7, window_bounds = array<i64: 256, 1>}]} {
    %c0 = arith.constant 0 : index
    %c0_0 = arith.constant 0 : index
    %0 = vector.load %arg1[%c0, %c0_0] : memref<256x8xf32, #tpu.memory_space<vmem>>, vector<256x8xf32>
    %c0_1 = arith.constant 0 : index
    %c0_2 = arith.constant 0 : index
    %1 = vector.load %arg2[%c0_1, %c0_2] : memref<8x128xf32, #tpu.memory_space<vmem>>, vector<8x128xf32>
    %cst = arith.constant dense<0.000000e+00> : vector<256x128xf32>
    %2 = tpu.matmul %0, %1, %cst {dimension_numbers = #tpu.dot_dimension_numbers<[1], [0], [0], [1], [0, 0, 1, 1], [], []>} : vector<256x8xf32>, vector<8x128xf32>, vector<256x128xf32> -> vector<256x128xf32>
    %c0_3 = arith.constant 0 : index
    %c0_4 = arith.constant 0 : index
    %3 = vector.load %arg3[%c0_3, %c0_4] : memref<1x128xf32, #tpu.memory_space<vmem>>, vector<1x128xf32>
    %4 = vector.broadcast %3 : vector<1x128xf32> to vector<256x128xf32>
    %5 = arith.addf %2, %4 : vector<256x128xf32>
    %cst_5 = arith.constant 0.000000e+00 : f32
    %6 = vector.broadcast %cst_5 : f32 to vector<256x128xf32>
    %7 = arith.maximumf %5, %6 : vector<256x128xf32>
    %c0_6 = arith.constant 0 : index
    %c0_7 = arith.constant 0 : index
    %8 = vector.load %arg4[%c0_6, %c0_7] : memref<128x128xf32, #tpu.memory_space<vmem>>, vector<128x128xf32>
    %cst_8 = arith.constant dense<0.000000e+00> : vector<256x128xf32>
    %9 = tpu.matmul %7, %8, %cst_8 {dimension_numbers = #tpu.dot_dimension_numbers<[1], [0], [0], [1], [0, 0, 1, 1], [], []>} : vector<256x128xf32>, vector<128x128xf32>, vector<256x128xf32> -> vector<256x128xf32>
    %c0_9 = arith.constant 0 : index
    %c0_10 = arith.constant 0 : index
    %10 = vector.load %arg5[%c0_9, %c0_10] : memref<1x128xf32, #tpu.memory_space<vmem>>, vector<1x128xf32>
    %11 = vector.broadcast %10 : vector<1x128xf32> to vector<256x128xf32>
    %12 = arith.addf %9, %11 : vector<256x128xf32>
    %cst_11 = arith.constant 0.000000e+00 : f32
    %13 = vector.broadcast %cst_11 : f32 to vector<256x128xf32>
    %14 = arith.maximumf %12, %13 : vector<256x128xf32>
    %c0_12 = arith.constant 0 : index
    %c0_13 = arith.constant 0 : index
    %15 = vector.load %arg6[%c0_12, %c0_13] : memref<1x128xf32, #tpu.memory_space<vmem>>, vector<1x128xf32>
    %16 = vector.broadcast %15 : vector<1x128xf32> to vector<256x128xf32>
    %17 = arith.mulf %14, %16 : vector<256x128xf32>
    %cst_14 = arith.constant dense<0.000000e+00> : vector<256xf32>
    %18 = vector.multi_reduction <add>, %17, %cst_14 [1] : vector<256x128xf32> to vector<256xf32>
    %19 = vector.shape_cast %18 : vector<256xf32> to vector<256x1xf32>
    %c0_15 = arith.constant 0 : index
    %c0_16 = arith.constant 0 : index
    %20 = vector.load %arg7[%c0_15, %c0_16] : memref<1x1xf32, #tpu.memory_space<vmem>>, vector<1x1xf32>
    %21 = vector.broadcast %20 : vector<1x1xf32> to vector<256x1xf32>
    %22 = arith.addf %19, %21 : vector<256x1xf32>
    %cst_17 = arith.constant 0.000000e+00 : f32
    %23 = vector.broadcast %cst_17 : f32 to vector<256x1xf32>
    %24 = arith.subf %23, %22 : vector<256x1xf32>
    %25 = math.exp %24 : vector<256x1xf32>
    %cst_18 = arith.constant 1.000000e+00 : f32
    %26 = vector.broadcast %cst_18 : f32 to vector<256x1xf32>
    %27 = arith.addf %26, %25 : vector<256x1xf32>
    %28 = tpu.reciprocal %27 : vector<256x1xf32> -> vector<256x1xf32>
    %c0_19 = arith.constant 0 : index
    %c0_20 = arith.constant 0 : index
    %29 = vector.load %arg8[%c0_19, %c0_20] : memref<256x1xf32, #tpu.memory_space<vmem>>, vector<256x1xf32>
    tpu.vector_store %arg8[%c0_19, %c0_20], %28 {strides = array<i32>} : memref<256x1xf32, #tpu.memory_space<vmem>>, vector<256x1xf32>,
    return
  }
  func.func @transform_0(%arg0: i32) -> (i32, i32) {
    %c0_i32 = arith.constant 0 : i32
    %c0_i32_0 = arith.constant 0 : i32
    return %arg0, %c0_i32 : i32, i32
  }
  func.func @transform_1(%arg0: i32) -> (i32, i32) {
    %c0_i32 = arith.constant 0 : i32
    %c0_i32_0 = arith.constant 0 : i32
    %c0_i32_1 = arith.constant 0 : i32
    return %c0_i32, %c0_i32_0 : i32, i32
  }
  func.func @transform_2(%arg0: i32) -> (i32, i32) {
    %c0_i32 = arith.constant 0 : i32
    %c0_i32_0 = arith.constant 0 : i32
    %c0_i32_1 = arith.constant 0 : i32
    return %c0_i32, %c0_i32_0 : i32, i32
  }
  func.func @transform_3(%arg0: i32) -> (i32, i32) {
    %c0_i32 = arith.constant 0 : i32
    %c0_i32_0 = arith.constant 0 : i32
    %c0_i32_1 = arith.constant 0 : i32
    return %c0_i32, %c0_i32_0 : i32, i32
  }
  func.func @transform_4(%arg0: i32) -> (i32, i32) {
    %c0_i32 = arith.constant 0 : i32
    %c0_i32_0 = arith.constant 0 : i32
    %c0_i32_1 = arith.constant 0 : i32
    return %c0_i32, %c0_i32_0 : i32, i32
  }
  func.func @transform_5(%arg0: i32) -> (i32, i32) {
    %c0_i32 = arith.constant 0 : i32
    %c0_i32_0 = arith.constant 0 : i32
    %c0_i32_1 = arith.constant 0 : i32
    return %c0_i32, %c0_i32_0 : i32, i32
  }
  func.func @transform_6(%arg0: i32) -> (i32, i32) {
    %c0_i32 = arith.constant 0 : i32
    %c0_i32_0 = arith.constant 0 : i32
    %c0_i32_1 = arith.constant 0 : i32
    return %c0_i32, %c0_i32_0 : i32, i32
  }
  func.func @transform_7(%arg0: i32) -> (i32, i32) {
    %c0_i32 = arith.constant 0 : i32
    %c0_i32_0 = arith.constant 0 : i32
    return %arg0, %c0_i32 : i32, i32
  }
}

</mosaic_0001>

<llo_original>
// kernel: tpu_custom_call.1
$region0: #{tpu_custom_call.1}
  #allocation0 [shape = 'u32[]', space=smem, size = 0x4, offset = 0x4, fixed_abs, tag = 'smem constant byte address 0x4 - core index']
  #allocation1 [shape = 'u32[144,128]{1,0:T(1,128)}', space=vmem, size = 0x12000, scoped, tag = 'internal scratch']
  #allocation2 [shape = 'f32[1,1]{1,0:T(1,128)S(1)}', space=vmem, size = 0x200, scoped, tag = 'scoped memory for tpu_custom_call.1']
  %s0 = inlined_call_operand.vmem [shape: f32[256,8], index: 0, kind: input, shape index: {}]
  %s1 = inlined_call_operand.vmem [shape: f32[8,128], index: 1, kind: input, shape index: {}]
  %s2 = inlined_call_operand.vmem [shape: f32[1,128], index: 2, kind: input, shape index: {}]
  %s3 = inlined_call_operand.vmem [shape: f32[128,128], index: 3, kind: input, shape index: {}]
  %s4 = inlined_call_operand.vmem [shape: f32[1,128], index: 4, kind: input, shape index: {}]
  %s5 = inlined_call_operand.vmem [shape: f32[1,128], index: 5, kind: input, shape index: {}]
  %s6 = inlined_call_operand.<no memory space> [shape: f32[1,1], index: 6, kind: input, shape index: {}]
  %s7 = inlined_call_operand.vmem [shape: f32[256,1], index: 7, kind: output, shape index: {}]
  %s8 = sld [smem:[#allocation0]]
  $region38: #{tpu_custom_call.1} parent=0
    _
  %s10 = ssub.s32 1, %s8
  %s11 = scalar_select 0, %s10, %s8
  %v12 = vstv %s6
  %13 = vst [vmem:[#allocation2] sm:$0x1] %v12
  // Predicated region
  $region2: #{tpu_custom_call.1} parent=0 // pred_check
    _
  $region3: #{tpu_custom_call.1} parent=0 // pred_check_branch
    %15 = sbr.rel (0) target = $region5
  $region4: #{tpu_custom_call.1} parent=0 // pred_region
    _
  $region5: #{tpu_custom_call.1} parent=0 // pred_fallthru
    _
  // Predicated region
  $region6: #{tpu_custom_call.1} parent=0 // pred_check
    _
  $region7: #{tpu_custom_call.1} parent=0 // pred_check_branch
    %17 = sbr.rel (0) target = $region9
  $region8: #{tpu_custom_call.1} parent=0 // pred_region
    _
  $region9: #{tpu_custom_call.1} parent=0 // pred_fallthru
    _
  // Predicated region
  $region10: #{tpu_custom_call.1} parent=0 // pred_check
    _
  $region11: #{tpu_custom_call.1} parent=0 // pred_check_branch
    %19 = sbr.rel (0) target = $region13
  $region12: #{tpu_custom_call.1} parent=0 // pred_region
    _
  $region13: #{tpu_custom_call.1} parent=0 // pred_fallthru
    _
  // Predicated region
  $region14: #{tpu_custom_call.1} parent=0 // pred_check
    _
  $region15: #{tpu_custom_call.1} parent=0 // pred_check_branch
    %21 = sbr.rel (0) target = $region17
  $region16: #{tpu_custom_call.1} parent=0 // pred_region
    _
  $region17: #{tpu_custom_call.1} parent=0 // pred_fallthru
    _
  // Predicated region
  $region18: #{tpu_custom_call.1} parent=0 // pred_check
    _
  $region19: #{tpu_custom_call.1} parent=0 // pred_check_branch
    %23 = sbr.rel (0) target = $region21
  $region20: #{tpu_custom_call.1} parent=0 // pred_region
    _
  $region21: #{tpu_custom_call.1} parent=0 // pred_fallthru
    _
  // Predicated region
  $region22: #{tpu_custom_call.1} parent=0 // pred_check
    _
  $region23: #{tpu_custom_call.1} parent=0 // pred_check_branch
    %25 = sbr.rel (0) target = $region25
  $region24: #{tpu_custom_call.1} parent=0 // pred_region
    _
  $region25: #{tpu_custom_call.1} parent=0 // pred_fallthru
    _
  // Predicated region
  $region26: #{tpu_custom_call.1} parent=0 // pred_check
    _
  $region27: #{tpu_custom_call.1} parent=0 // pred_check_branch
    %27 = sbr.rel (0) target = $region29
  $region28: #{tpu_custom_call.1} parent=0 // pred_region
    _
  $region29: #{tpu_custom_call.1} parent=0 // pred_fallthru
    _
  %v28 = vld [vmem:[%s0] sm:$0xff]
  %v29 = vld [vmem:[%s0 + $0x8] sm:$0xff]
  %v30 = vld [vmem:[%s0 + $0x10] sm:$0xff]
  %v31 = vld [vmem:[%s0 + $0x18] sm:$0xff]
  %v32 = vld [vmem:[%s0 + $0x20] sm:$0xff]
  %v33 = vld [vmem:[%s0 + $0x28] sm:$0xff]
  %v34 = vld [vmem:[%s0 + $0x30] sm:$0xff]
  %v35 = vld [vmem:[%s0 + $0x38] sm:$0xff]
  %v36 = vld [vmem:[%s0 + $0x40] sm:$0xff]
  %v37 = vld [vmem:[%s0 + $0x48] sm:$0xff]
  %v38 = vld [vmem:[%s0 + $0x50] sm:$0xff]
  %v39 = vld [vmem:[%s0 + $0x58] sm:$0xff]
  %v40 = vld [vmem:[%s0 + $0x60] sm:$0xff]
  %v41 = vld [vmem:[%s0 + $0x68] sm:$0xff]
  %v42 = vld [vmem:[%s0 + $0x70] sm:$0xff]
  %v43 = vld [vmem:[%s0 + $0x78] sm:$0xff]
  %v44 = vld [vmem:[%s0 + $0x80] sm:$0xff]
  %v45 = vld [vmem:[%s0 + $0x88] sm:$0xff]
  %v46 = vld [vmem:[%s0 + $0x90] sm:$0xff]
  %v47 = vld [vmem:[%s0 + $0x98] sm:$0xff]
  %v48 = vld [vmem:[%s0 + $0xa0] sm:$0xff]
  %v49 = vld [vmem:[%s0 + $0xa8] sm:$0xff]
  %v50 = vld [vmem:[%s0 + $0xb0] sm:$0xff]
  %v51 = vld [vmem:[%s0 + $0xb8] sm:$0xff]
  %v52 = vld [vmem:[%s0 + $0xc0] sm:$0xff]
  %v53 = vld [vmem:[%s0 + $0xc8] sm:$0xff]
  %v54 = vld [vmem:[%s0 + $0xd0] sm:$0xff]
  %v55 = vld [vmem:[%s0 + $0xd8] sm:$0xff]
  %v56 = vld [vmem:[%s0 + $0xe0] sm:$0xff]
  %v57 = vld [vmem:[%s0 + $0xe8] sm:$0xff]
  %v58 = vld [vmem:[%s0 + $0xf0] sm:$0xff]
  %v59 = vld [vmem:[%s0 + $0xf8] sm:$0xff]
  %v60 = vld [vmem:[%s1] sm:$0xff]
  %v61 = vld [vmem:[%s2] sm:$0x1]
  %v63 = vlaneseq
  %v64 = vshrl.u32 %v63, 7
  %v65 = vsub.s32 0, %v64
  %v66 = vrot.slane %v61, %v65
  %vm68 = vcmask 64512
  %v70 = vsel %vm68, %v28, 0
  %v73 = vsel %vm68, %v29, 0
  %v76 = vsel %vm68, %v30, 0
  %v79 = vsel %vm68, %v31, 0
  %v82 = vsel %vm68, %v32, 0
  %v85 = vsel %vm68, %v33, 0
  %v88 = vsel %vm68, %v34, 0
  %v91 = vsel %vm68, %v35, 0
  %v94 = vsel %vm68, %v36, 0
  %v97 = vsel %vm68, %v37, 0
  %v100 = vsel %vm68, %v38, 0
  %v103 = vsel %vm68, %v39, 0
  %v106 = vsel %vm68, %v40, 0
  %v109 = vsel %vm68, %v41, 0
  %v112 = vsel %vm68, %v42, 0
  %v115 = vsel %vm68, %v43, 0
  %v118 = vsel %vm68, %v44, 0
  %v121 = vsel %vm68, %v45, 0
  %v124 = vsel %vm68, %v46, 0
  %v127 = vsel %vm68, %v47, 0
  %v130 = vsel %vm68, %v48, 0
  %v133 = vsel %vm68, %v49, 0
  %v136 = vsel %vm68, %v50, 0
  %v139 = vsel %vm68, %v51, 0
  %v142 = vsel %vm68, %v52, 0
  %v145 = vsel %vm68, %v53, 0
  %v148 = vsel %vm68, %v54, 0
  %v151 = vsel %vm68, %v55, 0
  %v154 = vsel %vm68, %v56, 0
  %v157 = vsel %vm68, %v57, 0
  %v160 = vsel %vm68, %v58, 0
  %v163 = vsel %vm68, %v59, 0
  %165 = vmatprep.subr.mxu0 0.0
  %166 = vmatpush1.msra.mxu0 %v60
  %167 = vmatprep.subr.mxu0 0.0
  %168 = vmatpush1.msra.mxu0 0.0
  %169 = vmatprep.subr.mxu0 0.0
  %170 = vmatpush1.msra.mxu0 0.0
  %171 = vmatprep.subr.mxu0 0.0
  %172 = vmatpush1.msra.mxu0 0.0
  %173 = vmatprep.subr.mxu0 0.0
  %174 = vmatpush1.msra.mxu0 0.0
  %175 = vmatprep.subr.mxu0 0.0
  %176 = vmatpush1.msra.mxu0 0.0
  %177 = vmatprep.subr.mxu0 0.0
  %178 = vmatpush1.msra.mxu0 0.0
  %179 = vmatprep.subr.mxu0 0.0
  %180 = vmatpush1.msra.mxu0 0.0
  %181 = vmatprep.subr.mxu0 0.0
  %182 = vmatpush1.msra.mxu0 0.0
  %183 = vmatprep.subr.mxu0 0.0
  %184 = vmatpush1.msra.mxu0 0.0
  %185 = vmatprep.subr.mxu0 0.0
  %186 = vmatpush1.msra.mxu0 0.0
  %187 = vmatprep.subr.mxu0 0.0
  %188 = vmatpush1.msra.mxu0 0.0
  %189 = vmatprep.subr.mxu0 0.0
  %190 = vmatpush1.msra.mxu0 0.0
  %191 = vmatprep.subr.mxu0 0.0
  %192 = vmatpush1.msra.mxu0 0.0
  %193 = vmatprep.subr.mxu0 0.0
  %194 = vmatpush1.msra.mxu0 0.0
  %195 = vmatprep.subr.mxu0 0.0
  %196 = vmatpush1.msra.mxu0 0.0
  %197 = vmatprep.subr.mxu0 0.0
  %198 = vmatpush1.msra.mxu0 0.0
  %199 = vmatprep.subr.mxu0 0.0
  %200 = vmatpush1.msra.mxu0 0.0
  %201 = vmatprep.subr.mxu0 0.0
  %202 = vmatpush1.msra.mxu0 0.0
  %203 = vmatprep.subr.mxu0 0.0
  %204 = vmatpush1.msra.mxu0 0.0
  %205 = vmatprep.subr.mxu0 0.0
  %206 = vmatpush1.msra.mxu0 0.0
  %207 = vmatprep.subr.mxu0 0.0
  %208 = vmatpush1.msra.mxu0 0.0
  %209 = vmatprep.subr.mxu0 0.0
  %210 = vmatpush1.msra.mxu0 0.0
  %211 = vmatprep.subr.mxu0 0.0
  %212 = vmatpush1.msra.mxu0 0.0
  %213 = vmatprep.subr.mxu0 0.0
  %214 = vmatpush1.msra.mxu0 0.0
  %215 = vmatprep.subr.mxu0 0.0
  %216 = vmatpush1.msra.mxu0 0.0
  %217 = vmatprep.subr.mxu0 0.0
  %218 = vmatpush1.msra.mxu0 0.0
  %219 = vmatprep.subr.mxu0 0.0
  %220 = vmatpush1.msra.mxu0 0.0
  %221 = vmatprep.subr.mxu0 0.0
  %222 = vmatpush1.msra.mxu0 0.0
  %223 = vmatprep.subr.mxu0 0.0
  %224 = vmatpush1.msra.mxu0 0.0
  %225 = vmatprep.subr.mxu0 0.0
  %226 = vmatpush1.msra.mxu0 0.0
  %227 = vmatprep.subr.mxu0 0.0
  %228 = vmatpush1.msra.mxu0 0.0
  %229 = vmatprep.mubr.f32.mxu0 0.0
  %230 = vmatmul.mubr.f32.gmra.mrb[0].mxu0 %v70
  %v231 = vpop.f32.mrb[0].mxu0
  %v232 = vadd.f32 %v66, %v231
  %v233 = vpop.f32.mrb[0].mxu0
  %234 = vmatprep.mubr.f32.mxu0 0.0
  %235 = vmatmul.mubr.f32.gmra.mrb[0].mxu0 %v73
  %v236 = vpop.f32.mrb[0].mxu0
  %v237 = vadd.f32 %v66, %v236
  %v238 = vpop.f32.mrb[0].mxu0
  %239 = vmatprep.mubr.f32.mxu0 0.0
  %240 = vmatmul.mubr.f32.gmra.mrb[0].mxu0 %v76
  %v241 = vpop.f32.mrb[0].mxu0
  %v242 = vadd.f32 %v66, %v241
  %v243 = vpop.f32.mrb[0].mxu0
  %244 = vmatprep.mubr.f32.mxu0 0.0
  %245 = vmatmul.mubr.f32.gmra.mrb[0].mxu0 %v79
  %v246 = vpop.f32.mrb[0].mxu0
  %v247 = vadd.f32 %v66, %v246
  %v248 = vpop.f32.mrb[0].mxu0
  %249 = vmatprep.mubr.f32.mxu0 0.0
  %250 = vmatmul.mubr.f32.gmra.mrb[0].mxu0 %v82
  %v251 = vpop.f32.mrb[0].mxu0
  %v252 = vadd.f32 %v66, %v251
  %v253 = vpop.f32.mrb[0].mxu0
  %254 = vmatprep.mubr.f32.mxu0 0.0
  %255 = vmatmul.mubr.f32.gmra.mrb[0].mxu0 %v85
  %v256 = vpop.f32.mrb[0].mxu0
  %v257 = vadd.f32 %v66, %v256
  %v258 = vpop.f32.mrb[0].mxu0
  %259 = vmatprep.mubr.f32.mxu0 0.0
  %260 = vmatmul.mubr.f32.gmra.mrb[0].mxu0 %v88
  %v261 = vpop.f32.mrb[0].mxu0
  %v262 = vadd.f32 %v66, %v261
  %v263 = vpop.f32.mrb[0].mxu0
  %264 = vmatprep.mubr.f32.mxu0 0.0
  %265 = vmatmul.mubr.f32.gmra.mrb[0].mxu0 %v91
  %v266 = vpop.f32.mrb[0].mxu0
  %v267 = vadd.f32 %v66, %v266
  %v268 = vpop.f32.mrb[0].mxu0
  %269 = vmatprep.mubr.f32.mxu0 0.0
  %270 = vmatmul.mubr.f32.gmra.mrb[0].mxu0 %v94
  %v271 = vpop.f32.mrb[0].mxu0
  %v272 = vadd.f32 %v66, %v271
  %v273 = vpop.f32.mrb[0].mxu0
  %274 = vmatprep.mubr.f32.mxu0 0.0
  %275 = vmatmul.mubr.f32.gmra.mrb[0].mxu0 %v97
  %v276 = vpop.f32.mrb[0].mxu0
  %v277 = vadd.f32 %v66, %v276
  %v278 = vpop.f32.mrb[0].mxu0
  %279 = vmatprep.mubr.f32.mxu0 0.0
  %280 = vmatmul.mubr.f32.gmra.mrb[0].mxu0 %v100
  %v281 = vpop.f32.mrb[0].mxu0
  %v282 = vadd.f32 %v66, %v281
  %v283 = vpop.f32.mrb[0].mxu0
  %284 = vmatprep.mubr.f32.mxu0 0.0
  %285 = vmatmul.mubr.f32.gmra.mrb[0].mxu0 %v103
  %v286 = vpop.f32.mrb[0].mxu0
  %v287 = vadd.f32 %v66, %v286
  %v288 = vpop.f32.mrb[0].mxu0
  %289 = vmatprep.mubr.f32.mxu0 0.0
  %290 = vmatmul.mubr.f32.gmra.mrb[0].mxu0 %v106
  %v291 = vpop.f32.mrb[0].mxu0
  %v292 = vadd.f32 %v66, %v291
  %v293 = vpop.f32.mrb[0].mxu0
  %294 = vmatprep.mubr.f32.mxu0 0.0
  %295 = vmatmul.mubr.f32.gmra.mrb[0].mxu0 %v109
  %v296 = vpop.f32.mrb[0].mxu0
  %v297 = vadd.f32 %v66, %v296
  %v298 = vpop.f32.mrb[0].mxu0
  %299 = vmatprep.mubr.f32.mxu0 0.0
  %300 = vmatmul.mubr.f32.gmra.mrb[0].mxu0 %v112
  %v301 = vpop.f32.mrb[0].mxu0
  %v302 = vadd.f32 %v66, %v301
  %v303 = vpop.f32.mrb[0].mxu0
  %304 = vmatprep.mubr.f32.mxu0 0.0
  %305 = vmatmul.mubr.f32.gmra.mrb[0].mxu0 %v115
  %v306 = vpop.f32.mrb[0].mxu0
  %v307 = vadd.f32 %v66, %v306
  %v308 = vpop.f32.mrb[0].mxu0
  %309 = vmatprep.mubr.f32.mxu0 0.0
  %310 = vmatmul.mubr.f32.gmra.mrb[0].mxu0 %v118
  %v311 = vpop.f32.mrb[0].mxu0
  %v312 = vadd.f32 %v66, %v311
  %v313 = vpop.f32.mrb[0].mxu0
  %314 = vmatprep.mubr.f32.mxu0 0.0
  %315 = vmatmul.mubr.f32.gmra.mrb[0].mxu0 %v121
  %v316 = vpop.f32.mrb[0].mxu0
  %v317 = vadd.f32 %v66, %v316
  %v318 = vpop.f32.mrb[0].mxu0
  %319 = vmatprep.mubr.f32.mxu0 0.0
  %320 = vmatmul.mubr.f32.gmra.mrb[0].mxu0 %v124
  %v321 = vpop.f32.mrb[0].mxu0
  %v322 = vadd.f32 %v66, %v321
  %v323 = vpop.f32.mrb[0].mxu0
  %324 = vmatprep.mubr.f32.mxu0 0.0
  %325 = vmatmul.mubr.f32.gmra.mrb[0].mxu0 %v127
  %v326 = vpop.f32.mrb[0].mxu0
  %v327 = vadd.f32 %v66, %v326
  %v328 = vpop.f32.mrb[0].mxu0
  %329 = vmatprep.mubr.f32.mxu0 0.0
  %330 = vmatmul.mubr.f32.gmra.mrb[0].mxu0 %v130
  %v331 = vpop.f32.mrb[0].mxu0
  %v332 = vadd.f32 %v66, %v331
  %v333 = vpop.f32.mrb[0].mxu0
  %334 = vmatprep.mubr.f32.mxu0 0.0
  %335 = vmatmul.mubr.f32.gmra.mrb[0].mxu0 %v133
  %v336 = vpop.f32.mrb[0].mxu0
  %v337 = vadd.f32 %v66, %v336
  %v338 = vpop.f32.mrb[0].mxu0
  %339 = vmatprep.mubr.f32.mxu0 0.0
  %340 = vmatmul.mubr.f32.gmra.mrb[0].mxu0 %v136
  %v341 = vpop.f32.mrb[0].mxu0
  %v342 = vadd.f32 %v66, %v341
  %v343 = vpop.f32.mrb[0].mxu0
  %344 = vmatprep.mubr.f32.mxu0 0.0
  %345 = vmatmul.mubr.f32.gmra.mrb[0].mxu0 %v139
  %v346 = vpop.f32.mrb[0].mxu0
  %v347 = vadd.f32 %v66, %v346
  %v348 = vpop.f32.mrb[0].mxu0
  %349 = vmatprep.mubr.f32.mxu0 0.0
  %350 = vmatmul.mubr.f32.gmra.mrb[0].mxu0 %v142
  %v351 = vpop.f32.mrb[0].mxu0
  %v352 = vadd.f32 %v66, %v351
  %v353 = vpop.f32.mrb[0].mxu0
  %354 = vmatprep.mubr.f32.mxu0 0.0
  %355 = vmatmul.mubr.f32.gmra.mrb[0].mxu0 %v145
  %v356 = vpop.f32.mrb[0].mxu0
  %v357 = vadd.f32 %v66, %v356
  %v358 = vpop.f32.mrb[0].mxu0
  %359 = vmatprep.mubr.f32.mxu0 0.0
  %360 = vmatmul.mubr.f32.gmra.mrb[0].mxu0 %v148
  %v361 = vpop.f32.mrb[0].mxu0
  %v362 = vadd.f32 %v66, %v361
  %v363 = vpop.f32.mrb[0].mxu0
  %364 = vmatprep.mubr.f32.mxu0 0.0
  %365 = vmatmul.mubr.f32.gmra.mrb[0].mxu0 %v151
  %v366 = vpop.f32.mrb[0].mxu0
  %v367 = vadd.f32 %v66, %v366
  %v368 = vpop.f32.mrb[0].mxu0
  %369 = vmatprep.mubr.f32.mxu0 0.0
  %370 = vmatmul.mubr.f32.gmra.mrb[0].mxu0 %v154
  %v371 = vpop.f32.mrb[0].mxu0
  %v372 = vadd.f32 %v66, %v371
  %v373 = vpop.f32.mrb[0].mxu0
  %374 = vmatprep.mubr.f32.mxu0 0.0
  %375 = vmatmul.mubr.f32.gmra.mrb[0].mxu0 %v157
  %v376 = vpop.f32.mrb[0].mxu0
  %v377 = vadd.f32 %v66, %v376
  %v378 = vpop.f32.mrb[0].mxu0
  %379 = vmatprep.mubr.f32.mxu0 0.0
  %380 = vmatmul.mubr.f32.gmra.mrb[0].mxu0 %v160
  %v381 = vpop.f32.mrb[0].mxu0
  %v382 = vadd.f32 %v66, %v381
  %v383 = vpop.f32.mrb[0].mxu0
  %384 = vmatprep.mubr.f32.mxu0 0.0
  %385 = vmatmul.mubr.f32.gmra.mrb[0].mxu0 %v163
  %v386 = vpop.f32.mrb[0].mxu0
  %v387 = vadd.f32 %v66, %v386
  %v388 = vpop.f32.mrb[0].mxu0
  %389 = vdwg.mxu0
  %v390 = vmax.f32 %v232, 0.0
  %v391 = vmax.f32 %v237, 0.0
  %v392 = vmax.f32 %v242, 0.0
  %v393 = vmax.f32 %v247, 0.0
  %v394 = vmax.f32 %v252, 0.0
  %v395 = vmax.f32 %v257, 0.0
  %v396 = vmax.f32 %v262, 0.0
  %v397 = vmax.f32 %v267, 0.0
  %v398 = vmax.f32 %v272, 0.0
  %v399 = vmax.f32 %v277, 0.0
  %v400 = vmax.f32 %v282, 0.0
  %v401 = vmax.f32 %v287, 0.0
  %v402 = vmax.f32 %v292, 0.0
  %v403 = vmax.f32 %v297, 0.0
  %v404 = vmax.f32 %v302, 0.0
  %v405 = vmax.f32 %v307, 0.0
  %v406 = vmax.f32 %v312, 0.0
  %v407 = vmax.f32 %v317, 0.0
  %v408 = vmax.f32 %v322, 0.0
  %v409 = vmax.f32 %v327, 0.0
  %v410 = vmax.f32 %v332, 0.0
  %v411 = vmax.f32 %v337, 0.0
  %v412 = vmax.f32 %v342, 0.0
  %v413 = vmax.f32 %v347, 0.0
  %v414 = vmax.f32 %v352, 0.0
  %v415 = vmax.f32 %v357, 0.0
  %v416 = vmax.f32 %v362, 0.0
  %v417 = vmax.f32 %v367, 0.0
  %v418 = vmax.f32 %v372, 0.0
  %v419 = vmax.f32 %v377, 0.0
  %v420 = vmax.f32 %v382, 0.0
  %v421 = vmax.f32 %v387, 0.0
  %v422 = vld [vmem:[%s3] sm:$0xff]
  %v423 = vld [vmem:[%s3 + $0x8] sm:$0xff]
  %v424 = vld [vmem:[%s3 + $0x10] sm:$0xff]
  %v425 = vld [vmem:[%s3 + $0x18] sm:$0xff]
  %v426 = vld [vmem:[%s3 + $0x20] sm:$0xff]
  %v427 = vld [vmem:[%s3 + $0x28] sm:$0xff]
  %v428 = vld [vmem:[%s3 + $0x30] sm:$0xff]
  %v429 = vld [vmem:[%s3 + $0x38] sm:$0xff]
  %v430 = vld [vmem:[%s3 + $0x40] sm:$0xff]
  %v431 = vld [vmem:[%s3 + $0x48] sm:$0xff]
  %v432 = vld [vmem:[%s3 + $0x50] sm:$0xff]
  %v433 = vld [vmem:[%s3 + $0x58] sm:$0xff]
  %v434 = vld [vmem:[%s3 + $0x60] sm:$0xff]
  %v435 = vld [vmem:[%s3 + $0x68] sm:$0xff]
  %v436 = vld [vmem:[%s3 + $0x70] sm:$0xff]
  %v437 = vld [vmem:[%s3 + $0x78] sm:$0xff]
  %v438 = vld [vmem:[%s4] sm:$0x1]
  %v440 = vlaneseq
  %v441 = vshrl.u32 %v440, 7
  %v442 = vsub.s32 0, %v441
  %v443 = vrot.slane %v438, %v442
  %445 = vmatprep.subr.mxu0 0.0
  %446 = vmatpush1.msra.mxu0 %v422
  %447 = vmatprep.subr.mxu0 0.0
  %448 = vmatpush1.msra.mxu0 %v423
  %449 = vmatprep.subr.mxu0 0.0
  %450 = vmatpush1.msra.mxu0 %v424
  %451 = vmatprep.subr.mxu0 0.0
  %452 = vmatpush1.msra.mxu0 %v425
  %453 = vmatprep.subr.mxu0 0.0
  %454 = vmatpush1.msra.mxu0 %v426
  %455 = vmatprep.subr.mxu0 0.0
  %456 = vmatpush1.msra.mxu0 %v427
  %457 = vmatprep.subr.mxu0 0.0
  %458 = vmatpush1.msra.mxu0 %v428
  %459 = vmatprep.subr.mxu0 0.0
  %460 = vmatpush1.msra.mxu0 %v429
  %461 = vmatprep.subr.mxu0 0.0
  %462 = vmatpush1.msra.mxu0 %v430
  %463 = vmatprep.subr.mxu0 0.0
  %464 = vmatpush1.msra.mxu0 %v431
  %465 = vmatprep.subr.mxu0 0.0
  %466 = vmatpush1.msra.mxu0 %v432
  %467 = vmatprep.subr.mxu0 0.0
  %468 = vmatpush1.msra.mxu0 %v433
  %469 = vmatprep.subr.mxu0 0.0
  %470 = vmatpush1.msra.mxu0 %v434
  %471 = vmatprep.subr.mxu0 0.0
  %472 = vmatpush1.msra.mxu0 %v435
  %473 = vmatprep.subr.mxu0 0.0
  %474 = vmatpush1.msra.mxu0 %v436
  %475 = vmatprep.subr.mxu0 0.0
  %476 = vmatpush1.msra.mxu0 %v437
  %477 = vmatprep.subr.mxu0 0.0
  %478 = vmatpush1.msra.mxu0 0.0
  %479 = vmatprep.subr.mxu0 0.0
  %480 = vmatpush1.msra.mxu0 0.0
  %481 = vmatprep.subr.mxu0 0.0
  %482 = vmatpush1.msra.mxu0 0.0
  %483 = vmatprep.subr.mxu0 0.0
  %484 = vmatpush1.msra.mxu0 0.0
  %485 = vmatprep.subr.mxu0 0.0
  %486 = vmatpush1.msra.mxu0 0.0
  %487 = vmatprep.subr.mxu0 0.0
  %488 = vmatpush1.msra.mxu0 0.0
  %489 = vmatprep.subr.mxu0 0.0
  %490 = vmatpush1.msra.mxu0 0.0
  %491 = vmatprep.subr.mxu0 0.0
  %492 = vmatpush1.msra.mxu0 0.0
  %493 = vmatprep.subr.mxu0 0.0
  %494 = vmatpush1.msra.mxu0 0.0
  %495 = vmatprep.subr.mxu0 0.0
  %496 = vmatpush1.msra.mxu0 0.0
  %497 = vmatprep.subr.mxu0 0.0
  %498 = vmatpush1.msra.mxu0 0.0
  %499 = vmatprep.subr.mxu0 0.0
  %500 = vmatpush1.msra.mxu0 0.0
  %501 = vmatprep.subr.mxu0 0.0
  %502 = vmatpush1.msra.mxu0 0.0
  %503 = vmatprep.subr.mxu0 0.0
  %504 = vmatpush1.msra.mxu0 0.0
  %505 = vmatprep.subr.mxu0 0.0
  %506 = vmatpush1.msra.mxu0 0.0
  %507 = vmatprep.subr.mxu0 0.0
  %508 = vmatpush1.msra.mxu0 0.0
  %509 = vmatprep.mubr.f32.mxu0 0.0
  %510 = vmatmul.mubr.f32.gmra.mrb[0].mxu0 %v390
  %v511 = vpop.f32.mrb[0].mxu0
  %v512 = vadd.f32 %v443, %v511
  %v513 = vpop.f32.mrb[0].mxu0
  %514 = vmatprep.mubr.f32.mxu0 0.0
  %515 = vmatmul.mubr.f32.gmra.mrb[0].mxu0 %v391
  %v516 = vpop.f32.mrb[0].mxu0
  %v517 = vadd.f32 %v443, %v516
  %v518 = vpop.f32.mrb[0].mxu0
  %519 = vmatprep.mubr.f32.mxu0 0.0
  %520 = vmatmul.mubr.f32.gmra.mrb[0].mxu0 %v392
  %v521 = vpop.f32.mrb[0].mxu0
  %v522 = vadd.f32 %v443, %v521
  %v523 = vpop.f32.mrb[0].mxu0
  %524 = vmatprep.mubr.f32.mxu0 0.0
  %525 = vmatmul.mubr.f32.gmra.mrb[0].mxu0 %v393
  %v526 = vpop.f32.mrb[0].mxu0
  %v527 = vadd.f32 %v443, %v526
  %v528 = vpop.f32.mrb[0].mxu0
  %529 = vmatprep.mubr.f32.mxu0 0.0
  %530 = vmatmul.mubr.f32.gmra.mrb[0].mxu0 %v394
  %v531 = vpop.f32.mrb[0].mxu0
  %v532 = vadd.f32 %v443, %v531
  %v533 = vpop.f32.mrb[0].mxu0
  %534 = vmatprep.mubr.f32.mxu0 0.0
  %535 = vmatmul.mubr.f32.gmra.mrb[0].mxu0 %v395
  %v536 = vpop.f32.mrb[0].mxu0
  %v537 = vadd.f32 %v443, %v536
  %v538 = vpop.f32.mrb[0].mxu0
  %539 = vmatprep.mubr.f32.mxu0 0.0
  %540 = vmatmul.mubr.f32.gmra.mrb[0].mxu0 %v396
  %v541 = vpop.f32.mrb[0].mxu0
  %v542 = vadd.f32 %v443, %v541
  %v543 = vpop.f32.mrb[0].mxu0
  %544 = vmatprep.mubr.f32.mxu0 0.0
  %545 = vmatmul.mubr.f32.gmra.mrb[0].mxu0 %v397
  %v546 = vpop.f32.mrb[0].mxu0
  %v547 = vadd.f32 %v443, %v546
  %v548 = vpop.f32.mrb[0].mxu0
  %549 = vmatprep.mubr.f32.mxu0 0.0
  %550 = vmatmul.mubr.f32.gmra.mrb[0].mxu0 %v398
  %v551 = vpop.f32.mrb[0].mxu0
  %v552 = vadd.f32 %v443, %v551
  %v553 = vpop.f32.mrb[0].mxu0
  %554 = vmatprep.mubr.f32.mxu0 0.0
  %555 = vmatmul.mubr.f32.gmra.mrb[0].mxu0 %v399
  %v556 = vpop.f32.mrb[0].mxu0
  %v557 = vadd.f32 %v443, %v556
  %v558 = vpop.f32.mrb[0].mxu0
  %559 = vmatprep.mubr.f32.mxu0 0.0
  %560 = vmatmul.mubr.f32.gmra.mrb[0].mxu0 %v400
  %v561 = vpop.f32.mrb[0].mxu0
  %v562 = vadd.f32 %v443, %v561
  %v563 = vpop.f32.mrb[0].mxu0
  %564 = vmatprep.mubr.f32.mxu0 0.0
  %565 = vmatmul.mubr.f32.gmra.mrb[0].mxu0 %v401
  %v566 = vpop.f32.mrb[0].mxu0
  %v567 = vadd.f32 %v443, %v566
  %v568 = vpop.f32.mrb[0].mxu0
  %569 = vmatprep.mubr.f32.mxu0 0.0
  %570 = vmatmul.mubr.f32.gmra.mrb[0].mxu0 %v402
  %v571 = vpop.f32.mrb[0].mxu0
  %v572 = vadd.f32 %v443, %v571
  %v573 = vpop.f32.mrb[0].mxu0
  %574 = vmatprep.mubr.f32.mxu0 0.0
  %575 = vmatmul.mubr.f32.gmra.mrb[0].mxu0 %v403
  %v576 = vpop.f32.mrb[0].mxu0
  %v577 = vadd.f32 %v443, %v576
  %v578 = vpop.f32.mrb[0].mxu0
  %579 = vmatprep.mubr.f32.mxu0 0.0
  %580 = vmatmul.mubr.f32.gmra.mrb[0].mxu0 %v404
  %v581 = vpop.f32.mrb[0].mxu0
  %v582 = vadd.f32 %v443, %v581
  %v583 = vpop.f32.mrb[0].mxu0
  %584 = vmatprep.mubr.f32.mxu0 0.0
  %585 = vmatmul.mubr.f32.gmra.mrb[0].mxu0 %v405
  %v586 = vpop.f32.mrb[0].mxu0
  %v587 = vadd.f32 %v443, %v586
  %v588 = vpop.f32.mrb[0].mxu0
  %589 = vmatprep.mubr.f32.mxu0 0.0
  %590 = vmatmul.mubr.f32.gmra.mrb[0].mxu0 %v406
  %v591 = vpop.f32.mrb[0].mxu0
  %v592 = vadd.f32 %v443, %v591
  %v593 = vpop.f32.mrb[0].mxu0
  %594 = vmatprep.mubr.f32.mxu0 0.0
  %595 = vmatmul.mubr.f32.gmra.mrb[0].mxu0 %v407
  %v596 = vpop.f32.mrb[0].mxu0
  %v597 = vadd.f32 %v443, %v596
  %v598 = vpop.f32.mrb[0].mxu0
  %599 = vmatprep.mubr.f32.mxu0 0.0
  %600 = vmatmul.mubr.f32.gmra.mrb[0].mxu0 %v408
  %v601 = vpop.f32.mrb[0].mxu0
  %v602 = vadd.f32 %v443, %v601
  %v603 = vpop.f32.mrb[0].mxu0
  %604 = vmatprep.mubr.f32.mxu0 0.0
  %605 = vmatmul.mubr.f32.gmra.mrb[0].mxu0 %v409
  %v606 = vpop.f32.mrb[0].mxu0
  %v607 = vadd.f32 %v443, %v606
  %v608 = vpop.f32.mrb[0].mxu0
  %609 = vmatprep.mubr.f32.mxu0 0.0
  %610 = vmatmul.mubr.f32.gmra.mrb[0].mxu0 %v410
  %v611 = vpop.f32.mrb[0].mxu0
  %v612 = vadd.f32 %v443, %v611
  %v613 = vpop.f32.mrb[0].mxu0
  %614 = vmatprep.mubr.f32.mxu0 0.0
  %615 = vmatmul.mubr.f32.gmra.mrb[0].mxu0 %v411
  %v616 = vpop.f32.mrb[0].mxu0
  %v617 = vadd.f32 %v443, %v616
  %v618 = vpop.f32.mrb[0].mxu0
  %619 = vmatprep.mubr.f32.mxu0 0.0
  %620 = vmatmul.mubr.f32.gmra.mrb[0].mxu0 %v412
  %v621 = vpop.f32.mrb[0].mxu0
  %v622 = vadd.f32 %v443, %v621
  %v623 = vpop.f32.mrb[0].mxu0
  %624 = vmatprep.mubr.f32.mxu0 0.0
  %625 = vmatmul.mubr.f32.gmra.mrb[0].mxu0 %v413
  %v626 = vpop.f32.mrb[0].mxu0
  %v627 = vadd.f32 %v443, %v626
  %v628 = vpop.f32.mrb[0].mxu0
  %629 = vmatprep.mubr.f32.mxu0 0.0
  %630 = vmatmul.mubr.f32.gmra.mrb[0].mxu0 %v414
  %v631 = vpop.f32.mrb[0].mxu0
  %v632 = vadd.f32 %v443, %v631
  %v633 = vpop.f32.mrb[0].mxu0
  %634 = vmatprep.mubr.f32.mxu0 0.0
  %635 = vmatmul.mubr.f32.gmra.mrb[0].mxu0 %v415
  %v636 = vpop.f32.mrb[0].mxu0
  %v637 = vadd.f32 %v443, %v636
  %v638 = vpop.f32.mrb[0].mxu0
  %639 = vmatprep.mubr.f32.mxu0 0.0
  %640 = vmatmul.mubr.f32.gmra.mrb[0].mxu0 %v416
  %v641 = vpop.f32.mrb[0].mxu0
  %v642 = vadd.f32 %v443, %v641
  %v643 = vpop.f32.mrb[0].mxu0
  %644 = vmatprep.mubr.f32.mxu0 0.0
  %645 = vmatmul.mubr.f32.gmra.mrb[0].mxu0 %v417
  %v646 = vpop.f32.mrb[0].mxu0
  %v647 = vadd.f32 %v443, %v646
  %v648 = vpop.f32.mrb[0].mxu0
  %649 = vmatprep.mubr.f32.mxu0 0.0
  %650 = vmatmul.mubr.f32.gmra.mrb[0].mxu0 %v418
  %v651 = vpop.f32.mrb[0].mxu0
  %v652 = vadd.f32 %v443, %v651
  %v653 = vpop.f32.mrb[0].mxu0
  %654 = vmatprep.mubr.f32.mxu0 0.0
  %655 = vmatmul.mubr.f32.gmra.mrb[0].mxu0 %v419
  %v656 = vpop.f32.mrb[0].mxu0
  %v657 = vadd.f32 %v443, %v656
  %v658 = vpop.f32.mrb[0].mxu0
  %659 = vmatprep.mubr.f32.mxu0 0.0
  %660 = vmatmul.mubr.f32.gmra.mrb[0].mxu0 %v420
  %v661 = vpop.f32.mrb[0].mxu0
  %v662 = vadd.f32 %v443, %v661
  %v663 = vpop.f32.mrb[0].mxu0
  %664 = vmatprep.mubr.f32.mxu0 0.0
  %665 = vmatmul.mubr.f32.gmra.mrb[0].mxu0 %v421
  %v666 = vpop.f32.mrb[0].mxu0
  %v667 = vadd.f32 %v443, %v666
  %v668 = vpop.f32.mrb[0].mxu0
  %669 = vdwg.mxu0
  %v670 = vmax.f32 %v512, 0.0
  %v671 = vmax.f32 %v517, 0.0
  %v672 = vmax.f32 %v522, 0.0
  %v673 = vmax.f32 %v527, 0.0
  %v674 = vmax.f32 %v532, 0.0
  %v675 = vmax.f32 %v537, 0.0
  %v676 = vmax.f32 %v542, 0.0
  %v677 = vmax.f32 %v547, 0.0
  %v678 = vmax.f32 %v552, 0.0
  %v679 = vmax.f32 %v557, 0.0
  %v680 = vmax.f32 %v562, 0.0
  %v681 = vmax.f32 %v567, 0.0
  %v682 = vmax.f32 %v572, 0.0
  %v683 = vmax.f32 %v577, 0.0
  %v684 = vmax.f32 %v582, 0.0
  %v685 = vmax.f32 %v587, 0.0
  %v686 = vmax.f32 %v592, 0.0
  %v687 = vmax.f32 %v597, 0.0
  %v688 = vmax.f32 %v602, 0.0
  %v689 = vmax.f32 %v607, 0.0
  %v690 = vmax.f32 %v612, 0.0
  %v691 = vmax.f32 %v617, 0.0
  %v692 = vmax.f32 %v622, 0.0
  %v693 = vmax.f32 %v627, 0.0
  %v694 = vmax.f32 %v632, 0.0
  %v695 = vmax.f32 %v637, 0.0
  %v696 = vmax.f32 %v642, 0.0
  %v697 = vmax.f32 %v647, 0.0
  %v698 = vmax.f32 %v652, 0.0
  %v699 = vmax.f32 %v657, 0.0
  %v700 = vmax.f32 %v662, 0.0
  %v701 = vmax.f32 %v667, 0.0
  %v702 = vld [vmem:[%s5] sm:$0x1]
  %v704 = vlaneseq
  %v705 = vshrl.u32 %v704, 7
  %v706 = vsub.s32 0, %v705
  %v707 = vrot.slane %v702, %v706
  %v709 = vmul.f32 %v670, %v707
  %v710 = vmul.f32 %v671, %v707
  %v711 = vmul.f32 %v672, %v707
  %v712 = vmul.f32 %v673, %v707
  %v713 = vmul.f32 %v674, %v707
  %v714 = vmul.f32 %v675, %v707
  %v715 = vmul.f32 %v676, %v707
  %v716 = vmul.f32 %v677, %v707
  %v717 = vmul.f32 %v678, %v707
  %v718 = vmul.f32 %v679, %v707
  %v719 = vmul.f32 %v680, %v707
  %v720 = vmul.f32 %v681, %v707
  %v721 = vmul.f32 %v682, %v707
  %v722 = vmul.f32 %v683, %v707
  %v723 = vmul.f32 %v684, %v707
  %v724 = vmul.f32 %v685, %v707
  %v725 = vmul.f32 %v686, %v707
  %v726 = vmul.f32 %v687, %v707
  %v727 = vmul.f32 %v688, %v707
  %v728 = vmul.f32 %v689, %v707
  %v729 = vmul.f32 %v690, %v707
  %v730 = vmul.f32 %v691, %v707
  %v731 = vmul.f32 %v692, %v707
  %v732 = vmul.f32 %v693, %v707
  %v733 = vmul.f32 %v694, %v707
  %v734 = vmul.f32 %v695, %v707
  %v735 = vmul.f32 %v696, %v707
  %v736 = vmul.f32 %v697, %v707
  %v737 = vmul.f32 %v698, %v707
  %v738 = vmul.f32 %v699, %v707
  %v739 = vmul.f32 %v700, %v707
  %v740 = vmul.f32 %v701, %v707
  %741 = vadd.xlane.f32.xlu0 %v709
  %v742 = vpop.xlane.xlu0 %741
  %743 = vadd.xlane.f32.xlu0 %v710
  %v744 = vpop.xlane.xlu0 %743
  %745 = vadd.xlane.f32.xlu0 %v711
  %v746 = vpop.xlane.xlu0 %745
  %747 = vadd.xlane.f32.xlu0 %v712
  %v748 = vpop.xlane.xlu0 %747
  %749 = vadd.xlane.f32.xlu0 %v713
  %v750 = vpop.xlane.xlu0 %749
  %751 = vadd.xlane.f32.xlu0 %v714
  %v752 = vpop.xlane.xlu0 %751
  %753 = vadd.xlane.f32.xlu0 %v715
  %v754 = vpop.xlane.xlu0 %753
  %755 = vadd.xlane.f32.xlu0 %v716
  %v756 = vpop.xlane.xlu0 %755
  %757 = vadd.xlane.f32.xlu0 %v717
  %v758 = vpop.xlane.xlu0 %757
  %759 = vadd.xlane.f32.xlu0 %v718
  %v760 = vpop.xlane.xlu0 %759
  %761 = vadd.xlane.f32.xlu0 %v719
  %v762 = vpop.xlane.xlu0 %761
  %763 = vadd.xlane.f32.xlu0 %v720
  %v764 = vpop.xlane.xlu0 %763
  %765 = vadd.xlane.f32.xlu0 %v721
  %v766 = vpop.xlane.xlu0 %765
  %767 = vadd.xlane.f32.xlu0 %v722
  %v768 = vpop.xlane.xlu0 %767
  %769 = vadd.xlane.f32.xlu0 %v723
  %v770 = vpop.xlane.xlu0 %769
  %771 = vadd.xlane.f32.xlu0 %v724
  %v772 = vpop.xlane.xlu0 %771
  %773 = vadd.xlane.f32.xlu0 %v725
  %v774 = vpop.xlane.xlu0 %773
  %775 = vadd.xlane.f32.xlu0 %v726
  %v776 = vpop.xlane.xlu0 %775
  %777 = vadd.xlane.f32.xlu0 %v727
  %v778 = vpop.xlane.xlu0 %777
  %779 = vadd.xlane.f32.xlu0 %v728
  %v780 = vpop.xlane.xlu0 %779
  %781 = vadd.xlane.f32.xlu0 %v729
  %v782 = vpop.xlane.xlu0 %781
  %783 = vadd.xlane.f32.xlu0 %v730
  %v784 = vpop.xlane.xlu0 %783
  %785 = vadd.xlane.f32.xlu0 %v731
  %v786 = vpop.xlane.xlu0 %785
  %787 = vadd.xlane.f32.xlu0 %v732
  %v788 = vpop.xlane.xlu0 %787
  %789 = vadd.xlane.f32.xlu0 %v733
  %v790 = vpop.xlane.xlu0 %789
  %791 = vadd.xlane.f32.xlu0 %v734
  %v792 = vpop.xlane.xlu0 %791
  %793 = vadd.xlane.f32.xlu0 %v735
  %v794 = vpop.xlane.xlu0 %793
  %795 = vadd.xlane.f32.xlu0 %v736
  %v796 = vpop.xlane.xlu0 %795
  %797 = vadd.xlane.f32.xlu0 %v737
  %v798 = vpop.xlane.xlu0 %797
  %799 = vadd.xlane.f32.xlu0 %v738
  %v800 = vpop.xlane.xlu0 %799
  %801 = vadd.xlane.f32.xlu0 %v739
  %v802 = vpop.xlane.xlu0 %801
  %803 = vadd.xlane.f32.xlu0 %v740
  %v804 = vpop.xlane.xlu0 %803
  %v805 = vld [vmem:[#allocation2] sm:$0x1]
  %v807 = vlaneseq
  %v808 = vshrl.u32 %v807, 7
  %v809 = vsub.s32 0, %v808
  %v810 = vrot.slane %v805, %v809
  %v812 = vadd.f32 %v742, %v810
  %v813 = vadd.f32 %v744, %v810
  %v814 = vadd.f32 %v746, %v810
  %v815 = vadd.f32 %v748, %v810
  %v816 = vadd.f32 %v750, %v810
  %v817 = vadd.f32 %v752, %v810
  %v818 = vadd.f32 %v754, %v810
  %v819 = vadd.f32 %v756, %v810
  %v820 = vadd.f32 %v758, %v810
  %v821 = vadd.f32 %v760, %v810
  %v822 = vadd.f32 %v762, %v810
  %v823 = vadd.f32 %v764, %v810
  %v824 = vadd.f32 %v766, %v810
  %v825 = vadd.f32 %v768, %v810
  %v826 = vadd.f32 %v770, %v810
  %v827 = vadd.f32 %v772, %v810
  %v828 = vadd.f32 %v774, %v810
  %v829 = vadd.f32 %v776, %v810
  %v830 = vadd.f32 %v778, %v810
  %v831 = vadd.f32 %v780, %v810
  %v832 = vadd.f32 %v782, %v810
  %v833 = vadd.f32 %v784, %v810
  %v834 = vadd.f32 %v786, %v810
  %v835 = vadd.f32 %v788, %v810
  %v836 = vadd.f32 %v790, %v810
  %v837 = vadd.f32 %v792, %v810
  %v838 = vadd.f32 %v794, %v810
  %v839 = vadd.f32 %v796, %v810
  %v840 = vadd.f32 %v798, %v810
  %v841 = vadd.f32 %v800, %v810
  %v842 = vadd.f32 %v802, %v810
  %v843 = vadd.f32 %v804, %v810
  %v844 = vsub.f32 0.0, %v812
  %v845 = vsub.f32 0.0, %v813
  %v846 = vsub.f32 0.0, %v814
  %v847 = vsub.f32 0.0, %v815
  %v848 = vsub.f32 0.0, %v816
  %v849 = vsub.f32 0.0, %v817
  %v850 = vsub.f32 0.0, %v818
  %v851 = vsub.f32 0.0, %v819
  %v852 = vsub.f32 0.0, %v820
  %v853 = vsub.f32 0.0, %v821
  %v854 = vsub.f32 0.0, %v822
  %v855 = vsub.f32 0.0, %v823
  %v856 = vsub.f32 0.0, %v824
  %v857 = vsub.f32 0.0, %v825
  %v858 = vsub.f32 0.0, %v826
  %v859 = vsub.f32 0.0, %v827
  %v860 = vsub.f32 0.0, %v828
  %v861 = vsub.f32 0.0, %v829
  %v862 = vsub.f32 0.0, %v830
  %v863 = vsub.f32 0.0, %v831
  %v864 = vsub.f32 0.0, %v832
  %v865 = vsub.f32 0.0, %v833
  %v866 = vsub.f32 0.0, %v834
  %v867 = vsub.f32 0.0, %v835
  %v868 = vsub.f32 0.0, %v836
  %v869 = vsub.f32 0.0, %v837
  %v870 = vsub.f32 0.0, %v838
  %v871 = vsub.f32 0.0, %v839
  %v872 = vsub.f32 0.0, %v840
  %v873 = vsub.f32 0.0, %v841
  %v874 = vsub.f32 0.0, %v842
  %v875 = vsub.f32 0.0, %v843
  %v876 = vmul.f32 %v844, 1.442695
  %v877 = vpow.pop %v876
  %v878 = vmul.f32 %v845, 1.442695
  %v879 = vpow.pop %v878
  %v880 = vmul.f32 %v846, 1.442695
  %v881 = vpow.pop %v880
  %v882 = vmul.f32 %v847, 1.442695
  %v883 = vpow.pop %v882
  %v884 = vmul.f32 %v848, 1.442695
  %v885 = vpow.pop %v884
  %v886 = vmul.f32 %v849, 1.442695
  %v887 = vpow.pop %v886
  %v888 = vmul.f32 %v850, 1.442695
  %v889 = vpow.pop %v888
  %v890 = vmul.f32 %v851, 1.442695
  %v891 = vpow.pop %v890
  %v892 = vmul.f32 %v852, 1.442695
  %v893 = vpow.pop %v892
  %v894 = vmul.f32 %v853, 1.442695
  %v895 = vpow.pop %v894
  %v896 = vmul.f32 %v854, 1.442695
  %v897 = vpow.pop %v896
  %v898 = vmul.f32 %v855, 1.442695
  %v899 = vpow.pop %v898
  %v900 = vmul.f32 %v856, 1.442695
  %v901 = vpow.pop %v900
  %v902 = vmul.f32 %v857, 1.442695
  %v903 = vpow.pop %v902
  %v904 = vmul.f32 %v858, 1.442695
  %v905 = vpow.pop %v904
  %v906 = vmul.f32 %v859, 1.442695
  %v907 = vpow.pop %v906
  %v908 = vmul.f32 %v860, 1.442695
  %v909 = vpow.pop %v908
  %v910 = vmul.f32 %v861, 1.442695
  %v911 = vpow.pop %v910
  %v912 = vmul.f32 %v862, 1.442695
  %v913 = vpow.pop %v912
  %v914 = vmul.f32 %v863, 1.442695
  %v915 = vpow.pop %v914
  %v916 = vmul.f32 %v864, 1.442695
  %v917 = vpow.pop %v916
  %v918 = vmul.f32 %v865, 1.442695
  %v919 = vpow.pop %v918
  %v920 = vmul.f32 %v866, 1.442695
  %v921 = vpow.pop %v920
  %v922 = vmul.f32 %v867, 1.442695
  %v923 = vpow.pop %v922
  %v924 = vmul.f32 %v868, 1.442695
  %v925 = vpow.pop %v924
  %v926 = vmul.f32 %v869, 1.442695
  %v927 = vpow.pop %v926
  %v928 = vmul.f32 %v870, 1.442695
  %v929 = vpow.pop %v928
  %v930 = vmul.f32 %v871, 1.442695
  %v931 = vpow.pop %v930
  %v932 = vmul.f32 %v872, 1.442695
  %v933 = vpow.pop %v932
  %v934 = vmul.f32 %v873, 1.442695
  %v935 = vpow.pop %v934
  %v936 = vmul.f32 %v874, 1.442695
  %v937 = vpow.pop %v936
  %v938 = vmul.f32 %v875, 1.442695
  %v939 = vpow.pop %v938
  %v940 = vadd.f32 %v877, 1.0
  %v941 = vadd.f32 %v879, 1.0
  %v942 = vadd.f32 %v881, 1.0
  %v943 = vadd.f32 %v883, 1.0
  %v944 = vadd.f32 %v885, 1.0
  %v945 = vadd.f32 %v887, 1.0
  %v946 = vadd.f32 %v889, 1.0
  %v947 = vadd.f32 %v891, 1.0
  %v948 = vadd.f32 %v893, 1.0
  %v949 = vadd.f32 %v895, 1.0
  %v950 = vadd.f32 %v897, 1.0
  %v951 = vadd.f32 %v899, 1.0
  %v952 = vadd.f32 %v901, 1.0
  %v953 = vadd.f32 %v903, 1.0
  %v954 = vadd.f32 %v905, 1.0
  %v955 = vadd.f32 %v907, 1.0
  %v956 = vadd.f32 %v909, 1.0
  %v957 = vadd.f32 %v911, 1.0
  %v958 = vadd.f32 %v913, 1.0
  %v959 = vadd.f32 %v915, 1.0
  %v960 = vadd.f32 %v917, 1.0
  %v961 = vadd.f32 %v919, 1.0
  %v962 = vadd.f32 %v921, 1.0
  %v963 = vadd.f32 %v923, 1.0
  %v964 = vadd.f32 %v925, 1.0
  %v965 = vadd.f32 %v927, 1.0
  %v966 = vadd.f32 %v929, 1.0
  %v967 = vadd.f32 %v931, 1.0
  %v968 = vadd.f32 %v933, 1.0
  %v969 = vadd.f32 %v935, 1.0
  %v970 = vadd.f32 %v937, 1.0
  %v971 = vadd.f32 %v939, 1.0
  %v972 = vrcp.pop %v940
  %v973 = vrcp.pop %v941
  %v974 = vrcp.pop %v942
  %v975 = vrcp.pop %v943
  %v976 = vrcp.pop %v944
  %v977 = vrcp.pop %v945
  %v978 = vrcp.pop %v946
  %v979 = vrcp.pop %v947
  %v980 = vrcp.pop %v948
  %v981 = vrcp.pop %v949
  %v982 = vrcp.pop %v950
  %v983 = vrcp.pop %v951
  %v984 = vrcp.pop %v952
  %v985 = vrcp.pop %v953
  %v986 = vrcp.pop %v954
  %v987 = vrcp.pop %v955
  %v988 = vrcp.pop %v956
  %v989 = vrcp.pop %v957
  %v990 = vrcp.pop %v958
  %v991 = vrcp.pop %v959
  %v992 = vrcp.pop %v960
  %v993 = vrcp.pop %v961
  %v994 = vrcp.pop %v962
  %v995 = vrcp.pop %v963
  %v996 = vrcp.pop %v964
  %v997 = vrcp.pop %v965
  %v998 = vrcp.pop %v966
  %v999 = vrcp.pop %v967
  %v1000 = vrcp.pop %v968
  %v1001 = vrcp.pop %v969
  %v1002 = vrcp.pop %v970
  %v1003 = vrcp.pop %v971
  %vm1004 = vcmask 7168
  %1005 = vst.msk [vmem:[%s7] sm:$0xff] %vm1004, %v972
  %1006 = vst.msk [vmem:[%s7 + $0x8] sm:$0xff] %vm1004, %v973
  %1007 = vst.msk [vmem:[%s7 + $0x10] sm:$0xff] %vm1004, %v974
  %1008 = vst.msk [vmem:[%s7 + $0x18] sm:$0xff] %vm1004, %v975
  %1009 = vst.msk [vmem:[%s7 + $0x20] sm:$0xff] %vm1004, %v976
  %1010 = vst.msk [vmem:[%s7 + $0x28] sm:$0xff] %vm1004, %v977
  %1011 = vst.msk [vmem:[%s7 + $0x30] sm:$0xff] %vm1004, %v978
  %1012 = vst.msk [vmem:[%s7 + $0x38] sm:$0xff] %vm1004, %v979
  %1013 = vst.msk [vmem:[%s7 + $0x40] sm:$0xff] %vm1004, %v980
  %1014 = vst.msk [vmem:[%s7 + $0x48] sm:$0xff] %vm1004, %v981
  %1015 = vst.msk [vmem:[%s7 + $0x50] sm:$0xff] %vm1004, %v982
  %1016 = vst.msk [vmem:[%s7 + $0x58] sm:$0xff] %vm1004, %v983
  %1017 = vst.msk [vmem:[%s7 + $0x60] sm:$0xff] %vm1004, %v984
  %1018 = vst.msk [vmem:[%s7 + $0x68] sm:$0xff] %vm1004, %v985
  %1019 = vst.msk [vmem:[%s7 + $0x70] sm:$0xff] %vm1004, %v986
  %1020 = vst.msk [vmem:[%s7 + $0x78] sm:$0xff] %vm1004, %v987
  %1021 = vst.msk [vmem:[%s7 + $0x80] sm:$0xff] %vm1004, %v988
  %1022 = vst.msk [vmem:[%s7 + $0x88] sm:$0xff] %vm1004, %v989
  %1023 = vst.msk [vmem:[%s7 + $0x90] sm:$0xff] %vm1004, %v990
  %1024 = vst.msk [vmem:[%s7 + $0x98] sm:$0xff] %vm1004, %v991
  %1025 = vst.msk [vmem:[%s7 + $0xa0] sm:$0xff] %vm1004, %v992
  %1026 = vst.msk [vmem:[%s7 + $0xa8] sm:$0xff] %vm1004, %v993
  %1027 = vst.msk [vmem:[%s7 + $0xb0] sm:$0xff] %vm1004, %v994
  %1028 = vst.msk [vmem:[%s7 + $0xb8] sm:$0xff] %vm1004, %v995
  %1029 = vst.msk [vmem:[%s7 + $0xc0] sm:$0xff] %vm1004, %v996
  %1030 = vst.msk [vmem:[%s7 + $0xc8] sm:$0xff] %vm1004, %v997
  %1031 = vst.msk [vmem:[%s7 + $0xd0] sm:$0xff] %vm1004, %v998
  %1032 = vst.msk [vmem:[%s7 + $0xd8] sm:$0xff] %vm1004, %v999
  %1033 = vst.msk [vmem:[%s7 + $0xe0] sm:$0xff] %vm1004, %v1000
  %1034 = vst.msk [vmem:[%s7 + $0xe8] sm:$0xff] %vm1004, %v1001
  %1035 = vst.msk [vmem:[%s7 + $0xf0] sm:$0xff] %vm1004, %v1002
  %1036 = vst.msk [vmem:[%s7 + $0xf8] sm:$0xff] %vm1004, %v1003
  // Predicated region
  $region30: #{tpu_custom_call.1} parent=0 // pred_check
    _
  $region31: #{tpu_custom_call.1} parent=0 // pred_check_branch
    %1038 = sbr.rel (0) target = $region33
  $region32: #{tpu_custom_call.1} parent=0 // pred_region
    _
  $region33: #{tpu_custom_call.1} parent=0 // pred_fallthru
    _
  // Predicated region
  $region34: #{tpu_custom_call.1} parent=0 // pred_check
    _
  $region35: #{tpu_custom_call.1} parent=0 // pred_check_branch
    %1040 = sbr.rel (0) target = $region37
  $region36: #{tpu_custom_call.1} parent=0 // pred_region
    _
  $region37: #{tpu_custom_call.1} parent=0 // pred_fallthru
    _

</llo_original>
